<compile_context>
chip_gen: v7x
topology: tpu7x:2x2x1
jax: 0.10.0
libtpu: 0.0.40
codegen_flags: <defaults>
</compile_context>

<pallas_src>
import functools

import jax
import jax.numpy as jnp
from jax.experimental import pallas as pl
from jax.experimental.pallas import tpu as pltpu


def _avg_pool_kernel(x_ref, m_ref, o_ref, acc_ref, *, inv_num_tokens):
    # x_ref: (BB, TT, D)   m_ref: (BB, TT, 1)   o_ref: (BB, D)   acc_ref: (BB, D) f32
    t = pl.program_id(1)

    @pl.when(t == 0)
    def _init():
        acc_ref[...] = jnp.zeros_like(acc_ref)

    x = x_ref[...].astype(jnp.float32)          # f32 accumulation (bf16-safe)
    m = m_ref[...].astype(jnp.float32)          # (BB, TT, 1): lane-wise broadcast over D
    acc_ref[...] += jnp.sum(x * m, axis=1)      # (BB, D)

    @pl.when(t == pl.num_programs(1) - 1)
    def _finalize():
        # torch.mean over dim=1 divides by T (num_tokens), NOT by mask.sum().
        o_ref[...] = (acc_ref[...] * inv_num_tokens).astype(o_ref.dtype)


def _choose_tiles(B, T, D, x_itemsize, budget_bytes):
    """Pick (BB, TT): batch rows and tokens per block, aiming for ~budget-sized
    input blocks, BB a multiple of 8 (or full B), TT an exact divisor of T."""
    # Per (batch-row, token) VMEM bytes: the x slice plus the mask slice, which
    # is lane-padded from (., 1) to (., 128) in VMEM (assume <= 4-byte mask elems).
    per_token = D * x_itemsize + 128 * 4
    per_row = T * per_token
    if per_row <= budget_bytes:
        max_rows = max(1, budget_bytes // per_row)
        if max_rows >= B:
            return B, T
        if max_rows >= 8:
            return int((max_rows // 8) * 8), T
        return int(max_rows), T
    # A single full-T row exceeds the budget: tile the token axis with the
    # largest multiple-of-8 divisor of T that fits.
    tt_cap = max(8, budget_bytes // per_token)
    best = None
    tt = 8
    while tt <= min(T, tt_cap):
        if T % tt == 0:
            best = tt
        tt += 8
    if best is None:
        # TODO(synk): no clean multiple-of-8 divisor of T; fall back to full T
        # (may need a raised vmem limit for extreme T*D).
        best = T
    return 1, int(best)


def avg_pooler_aggregator(input_tensors, mask, *, block_budget_bytes=6 * 1024 * 1024):
    """input_tensors: (B, T, D); mask: (B, T). Returns (B, D): masked mean over
    tokens, dividing by T (matches torch.mean after zeroing masked positions)."""
    B, T, D = input_tensors.shape
    assert mask.shape == (B, T)

    BB, TT = _choose_tiles(B, T, D, input_tensors.dtype.itemsize, block_budget_bytes)
    nb = pl.cdiv(B, BB)
    nt = T // TT  # TT always divides T

    # (B, T, 1): trailing singleton so the in-kernel broadcast over D is lane-wise.
    # No dtype cast here: the cast rides on VPU slack inside the kernel.
    mask3 = mask.reshape(B, T, 1)

    kernel = functools.partial(_avg_pool_kernel, inv_num_tokens=1.0 / T)

    return pl.pallas_call(
        kernel,
        out_shape=jax.ShapeDtypeStruct((B, D), input_tensors.dtype),
        grid_spec=pltpu.PrefetchScalarGridSpec(
            num_scalar_prefetch=0,
            grid=(nb, nt),
            in_specs=[
                pl.BlockSpec((BB, TT, D), lambda b, t: (b, t, 0)),
                pl.BlockSpec((BB, TT, 1), lambda b, t: (b, t, 0)),
            ],
            out_specs=pl.BlockSpec((BB, D), lambda b, t: (b, 0)),
            scratch_shapes=[pltpu.VMEM((BB, D), jnp.float32)],
        ),
        compiler_params=pltpu.CompilerParams(
            dimension_semantics=("parallel", "arbitrary"),
            vmem_limit_bytes=32 * 1024 * 1024,
        ),
    )(input_tensors, mask3)


if __name__ == "__main__":
    key = jax.random.PRNGKey(0)
    kx, km = jax.random.split(key)

    # Small default-path check: full (B, T, D) fits one block, single grid step.
    B, T, D = 2, 8, 32
    x = jax.random.normal(kx, (B, T, D), dtype=jnp.float32)
    mask = (jax.random.uniform(km, (B, T)) > 0.3).astype(jnp.float32)

    out = jax.block_until_ready(avg_pooler_aggregator(x, mask))
    ref = jnp.mean(x * mask[:, :, None], axis=1)
    assert out.shape == (B, D)
    assert jnp.allclose(out, ref, atol=1e-6, rtol=1e-6)

    # Force the token-tiled accumulation path (grid over T, f32 scratch accumulator)
    # with a tiny block budget to exercise the init / accumulate / finalize logic.
    B2, T2, D2 = 4, 32, 128
    kx2, km2 = jax.random.split(jax.random.PRNGKey(0), 2)
    x2 = jax.random.normal(kx2, (B2, T2, D2), dtype=jnp.float32)
    mask2 = (jax.random.uniform(km2, (B2, T2)) > 0.5).astype(jnp.float32)
    out2 = jax.block_until_ready(
        avg_pooler_aggregator(x2, mask2, block_budget_bytes=16 * 1024)
    )
    ref2 = jnp.mean(x2 * mask2[:, :, None], axis=1)
    assert jnp.allclose(out2, ref2, atol=1e-5, rtol=1e-5)

    print("KERNEL_OK")
</pallas_src>

<mosaic_0001>
module attributes {stable_mosaic.version = 11 : i64} {
  func.func @_avg_pool_kernel(%arg0: i32, %arg1: i32, %arg2: memref<2x8x32xf32, #tpu.memory_space<vmem>>, %arg3: memref<2x8x1xf32, #tpu.memory_space<vmem>>, %arg4: memref<2x32xf32, #tpu.memory_space<vmem>>, %arg5: memref<2x32xf32, #tpu.memory_space<vmem>>) attributes {dimension_semantics = [#tpu.dimension_semantics<parallel>, #tpu.dimension_semantics<arbitrary>], iteration_bounds = array<i64: 1, 1>, scalar_prefetch = 0 : i64, scratch_operands = 1 : i64, tpu.core_type = #tpu.core_type<tc>, window_params = [{transform_indices = @transform_0, window_bounds = array<i64: 2, 8, 32>}, {transform_indices = @transform_1, window_bounds = array<i64: 2, 8, 1>}, {transform_indices = @transform_2, window_bounds = array<i64: 2, 32>}]} {
    %c0_i32 = arith.constant 0 : i32
    %0 = arith.cmpi eq, %arg1, %c0_i32 : i32
    %1 = arith.extui %0 : i1 to i32
    %c0_i32_0 = arith.constant 0 : i32
    %2 = arith.cmpi ne, %1, %c0_i32_0 : i32
    scf.if %2 {
      %cst_12 = arith.constant 0.000000e+00 : f32
      %14 = vector.broadcast %cst_12 : f32 to vector<2x32xf32>
      %c0_13 = arith.constant 0 : index
      %c0_14 = arith.constant 0 : index
      %15 = vector.load %arg5[%c0_13, %c0_14] : memref<2x32xf32, #tpu.memory_space<vmem>>, vector<2x32xf32>
      tpu.vector_store %arg5[%c0_13, %c0_14], %14 {strides = array<i32>} : memref<2x32xf32, #tpu.memory_space<vmem>>, vector<2x32xf32>,
    } else {
    }
    %c0 = arith.constant 0 : index
    %c0_1 = arith.constant 0 : index
    %c0_2 = arith.constant 0 : index
    %3 = vector.load %arg2[%c0, %c0_1, %c0_2] : memref<2x8x32xf32, #tpu.memory_space<vmem>>, vector<2x8x32xf32>
    %c0_3 = arith.constant 0 : index
    %c0_4 = arith.constant 0 : index
    %c0_5 = arith.constant 0 : index
    %4 = vector.load %arg3[%c0_3, %c0_4, %c0_5] : memref<2x8x1xf32, #tpu.memory_space<vmem>>, vector<2x8x1xf32>
    %c0_6 = arith.constant 0 : index
    %c0_7 = arith.constant 0 : index
    %5 = vector.load %arg5[%c0_6, %c0_7] : memref<2x32xf32, #tpu.memory_space<vmem>>, vector<2x32xf32>
    %6 = vector.broadcast %4 : vector<2x8x1xf32> to vector<2x8x32xf32>
    %7 = arith.mulf %3, %6 : vector<2x8x32xf32>
    %cst = arith.constant dense<0.000000e+00> : vector<2x32xf32>
    %8 = vector.multi_reduction <add>, %7, %cst [1] : vector<2x8x32xf32> to vector<2x32xf32>
    %9 = arith.addf %5, %8 : vector<2x32xf32>
    %c0_8 = arith.constant 0 : index
    %c0_9 = arith.constant 0 : index
    %10 = vector.load %arg5[%c0_8, %c0_9] : memref<2x32xf32, #tpu.memory_space<vmem>>, vector<2x32xf32>
    tpu.vector_store %arg5[%c0_8, %c0_9], %9 {strides = array<i32>} : memref<2x32xf32, #tpu.memory_space<vmem>>, vector<2x32xf32>,
    %c0_i32_10 = arith.constant 0 : i32
    %11 = arith.cmpi eq, %arg1, %c0_i32_10 : i32
    %12 = arith.extui %11 : i1 to i32
    %c0_i32_11 = arith.constant 0 : i32
    %13 = arith.cmpi ne, %12, %c0_i32_11 : i32
    scf.if %13 {
      %c0_12 = arith.constant 0 : index
      %c0_13 = arith.constant 0 : index
      %14 = vector.load %arg5[%c0_12, %c0_13] : memref<2x32xf32, #tpu.memory_space<vmem>>, vector<2x32xf32>
      %cst_14 = arith.constant 1.250000e-01 : f32
      %15 = vector.broadcast %cst_14 : f32 to vector<2x32xf32>
      %16 = arith.mulf %14, %15 : vector<2x32xf32>
      %c0_15 = arith.constant 0 : index
      %c0_16 = arith.constant 0 : index
      %17 = vector.load %arg4[%c0_15, %c0_16] : memref<2x32xf32, #tpu.memory_space<vmem>>, vector<2x32xf32>
      tpu.vector_store %arg4[%c0_15, %c0_16], %16 {strides = array<i32>} : memref<2x32xf32, #tpu.memory_space<vmem>>, vector<2x32xf32>,
    } else {
    }
    return
  }
  func.func @transform_0(%arg0: i32, %arg1: i32) -> (i32, i32, i32) {
    %c0_i32 = arith.constant 0 : i32
    %c0_i32_0 = arith.constant 0 : i32
    return %arg0, %arg1, %c0_i32 : i32, i32, i32
  }
  func.func @transform_1(%arg0: i32, %arg1: i32) -> (i32, i32, i32) {
    %c0_i32 = arith.constant 0 : i32
    %c0_i32_0 = arith.constant 0 : i32
    return %arg0, %arg1, %c0_i32 : i32, i32, i32
  }
  func.func @transform_2(%arg0: i32, %arg1: i32) -> (i32, i32) {
    %c0_i32 = arith.constant 0 : i32
    %c0_i32_0 = arith.constant 0 : i32
    return %arg0, %c0_i32 : i32, i32
  }
}

</mosaic_0001>

<llo_original>
// kernel: tpu_custom_call.1
$region0: #{tpu_custom_call.1}
  #allocation0 [shape = 'u32[]', space=smem, size = 0x4, offset = 0x4, fixed_abs, tag = 'smem constant byte address 0x4 - core index']
  #allocation1 [shape = 'u32[144,128]{1,0:T(1,128)}', space=vmem, size = 0x12000, scoped, tag = 'internal scratch']
  #allocation2 [shape = 'f32[2,32]{1,0:T(2,128)}', space=vmem, size = 0x400, scoped, tag = 'scratch operand']
  %s0 = inlined_call_operand.vmem [shape: f32[2,8,32], index: 0, kind: input, shape index: {}]
  %s1 = inlined_call_operand.vmem [shape: f32[2,8,1], index: 1, kind: input, shape index: {}]
  %s2 = inlined_call_operand.hbm [shape: f32[2,32], index: 2, kind: output, shape index: {}]
  %s3 = sld [smem:[#allocation0]]
  $region26: #{tpu_custom_call.1} parent=0
    _
  %s5 = ssub.s32 1, %s3
  %s6 = scalar_select 0, %s5, %s3
  $region1: #{tpu_custom_call.1} parent=0
    #allocation3 [shape = 'u8[1024]{0}', space=vmem, size = 0x400, scoped, tag = 'output window, operand 0, single buffered']
    #allocation4 [shape = 's32[1]{0}', space=sflag, size = 0x4, scoped, tag = 'scoped memory for tpu_custom_call.1']
    %7 = vsyncpa [#allocation4], 0
    // Predicated region
    $region2: #{tpu_custom_call.1} parent=1 // pred_check
      _
    $region3: #{tpu_custom_call.1} parent=1 // pred_check_branch
      %9 = sbr.rel (0) target = $region5
    $region4: #{tpu_custom_call.1} parent=1 // pred_region
      _
    $region5: #{tpu_custom_call.1} parent=1 // pred_fallthru
      _
    // Predicated region
    $region6: #{tpu_custom_call.1} parent=1 // pred_check
      _
    $region7: #{tpu_custom_call.1} parent=1 // pred_check_branch
      %11 = sbr.rel (0) target = $region9
    $region8: #{tpu_custom_call.1} parent=1 // pred_region
      _
    $region9: #{tpu_custom_call.1} parent=1 // pred_fallthru
      _
    %p12 = scmp.eq.s32.totalorder 0, 0
    // Predicated region
    $region10: #{tpu_custom_call.1} parent=1 // pred_check
      %p13 = pneg %p12
    $region11: #{tpu_custom_call.1} parent=1 // pred_check_branch
      %15 = sbr.rel (%p13) target = $region13
    $region12: #{tpu_custom_call.1} parent=1 // pred_region
      %vm16 = vcmask 254976
      %17 = vst.msk [vmem:[#allocation2] sm:$0x3] %vm16, 0.0
    $region13: #{tpu_custom_call.1} parent=1 // pred_fallthru
      _
    %v18 = vld [vmem:[%s0] sm:$0xff]
    %v19 = vld [vmem:[%s0 + $0x8] sm:$0xff]
    %v20 = vld [vmem:[%s1] sm:$0xff]
    %v21 = vld [vmem:[%s1 + $0x8] sm:$0xff]
    %v22 = vld [vmem:[#allocation2] sm:$0x3]
    %24 = vset.pattern.permute.xlu0 0
    %25 = vperm.xlu0 %24, %v20
    %v26 = vpop.permute.xlu0 %25
    %29 = vset.pattern.permute.xlu0 0
    %30 = vperm.xlu0 %29, %v21
    %v31 = vpop.permute.xlu0 %30
    %v33 = vmul.f32 %v18, %v26
    %v34 = vmul.f32 %v19, %v31
    %vm35 = vcmask 261120
    %v36 = vsel %vm35, %v33, 0.0
    %v37 = vrot.slane %v36, 4
    %v38 = vadd.f32 %v36, %v37
    %v39 = vrot.slane %v38, 2
    %v40 = vadd.f32 %v38, %v39
    %v41 = vrot.slane %v40, 1
    %v42 = vadd.f32 %v40, %v41
    %v43 = vsel %vm35, %v34, 0.0
    %v44 = vrot.slane %v43, 4
    %v45 = vadd.f32 %v43, %v44
    %v46 = vrot.slane %v45, 2
    %v47 = vadd.f32 %v45, %v46
    %v48 = vrot.slane %v47, 1
    %v49 = vadd.f32 %v47, %v48
    %vm52 = vcmask 1041409
    %v53 = vsel %vm52, %v49, %v42
    %v55 = vadd.f32 %v22, %v53
    %vm56 = vcmask 254976
    %57 = vst.msk [vmem:[#allocation2] sm:$0x3] %vm56, %v55
    // Predicated region
    $region14: #{tpu_custom_call.1} parent=1 // pred_check
      %p58 = pneg %p12
    $region15: #{tpu_custom_call.1} parent=1 // pred_check_branch
      %60 = sbr.rel (%p58) target = $region17
    $region16: #{tpu_custom_call.1} parent=1 // pred_region
      %v61 = vld [vmem:[#allocation2] sm:$0x3]
      %v62 = vmul.f32 %v61, 0.125
      %63 = vst.msk [vmem:[#allocation3] sm:$0x3] %vm56, %v62
    $region17: #{tpu_custom_call.1} parent=1 // pred_fallthru
      _
    // Predicated region
    $region18: #{tpu_custom_call.1} parent=1 // pred_check
      _
    $region19: #{tpu_custom_call.1} parent=1 // pred_check_branch
      %65 = sbr.rel (0) target = $region21
    $region20: #{tpu_custom_call.1} parent=1 // pred_region
      %s67 = ssub.s32 32, 32
      %68 = vsyncadd [#allocation4], %s67
      %s70 = sshll.u32 [#allocation3], 4
      %s71 = int_to_ptr.vmem [resolvable:$true] %s70
      %73 = dma.vmem_to_hbm [thread:$0]  %s71, 32, %s2, [#allocation4]
    $region21: #{tpu_custom_call.1} parent=1 // pred_fallthru
      _
    // Predicated region
    $region22: #{tpu_custom_call.1} parent=1 // pred_check
      _
    $region23: #{tpu_custom_call.1} parent=1 // pred_check_branch
      %75 = sbr.rel (0) target = $region25
    $region24: #{tpu_custom_call.1} parent=1 // pred_region
      %76 = dma.done [#allocation4], 32
    $region25: #{tpu_custom_call.1} parent=1 // pred_fallthru
      _
    %77 = vsyncpa [#allocation4], 1

</llo_original>
